<compile_context>
chip_gen: v7x
topology: tpu7x:2x2x1
jax: 0.10.0
libtpu: 0.0.40
codegen_flags: <defaults>
</compile_context>

<pallas_src>
import functools

import numpy as np
import jax
import jax.numpy as jnp
from jax.experimental import pallas as pl
from jax.experimental.pallas import tpu as pltpu

TILE_N_DEFAULT = 256   # max region-axis tile (sublanes), multiple of 8
TILE_T_CAP = 8192      # max triangle-axis tile (lanes), multiple of 128
N_TILE_TARGET = 4      # aim for >= this many N tiles (v7x megacore balance)


def _round_up(x, m):
    return -(-x // m) * m


def _vmem_capacity_bytes():
    try:
        return int(pltpu.get_tpu_info().vmem_capacity_bytes)
    except Exception:
        return 64 << 20      # conservative fallback (v7x per-TC VMEM)


# ----------------------------------------------------------------------------- kernel

def _energy_kernel(p_ref, out_ref, acc_ref, *, weight, norm, area):
    """Grid = (N tiles ['parallel'], T tiles ['arbitrary' reduction; often 1]).

    p_ref:   (9, TILE_N, TILE_T) planes [p0x,p0y,p0z, p1x,p1y,p1z, p2x,p2y,p2z]
    out_ref: (TILE_N, 1)         per-region loss term, written only at the last T step
    acc_ref: (TILE_N, 128)       wide running partial sum over the T axis (VALU only)
    """
    t = pl.program_id(1)

    @pl.when(t == 0)
    def _init():
        acc_ref[...] = jnp.zeros_like(acc_ref)

    p0x, p0y, p0z = p_ref[0], p_ref[1], p_ref[2]
    p1x, p1y, p1z = p_ref[3], p_ref[4], p_ref[5]
    p2x, p2y, p2z = p_ref[6], p_ref[7], p_ref[8]

    if area:
        ax, ay, az = p1x - p0x, p1y - p0y, p1z - p0z
        bx, by, bz = p2x - p1x, p2y - p1y, p2z - p1z
        cx = ay * bz - az * by
        cy = az * bx - ax * bz
        cz = ax * by - ay * bx
        val = jnp.sqrt(cx * cx + cy * cy + cz * cz)          # ||cross|| per triangle
    else:
        cx = p1y * p2z - p1z * p2y
        cy = p1z * p2x - p1x * p2z
        cz = p1x * p2y - p1y * p2x
        val = p0x * cx + p0y * cy + p0z * cz                  # triple product per tri

    # Fold the lane groups with pure VALU adds (128-aligned static slices, no
    # cross-lane movement, no per-step masked store). The XLU reduce happens
    # once, in the finalize below.
    n_groups = val.shape[-1] // 128
    partial = val[:, 0:128]
    for g in range(1, n_groups):
        partial = partial + val[:, g * 128:(g + 1) * 128]
    acc_ref[...] += partial

    @pl.when(t == pl.num_programs(1) - 1)
    def _finalize():
        acc = jnp.sum(acc_ref[...], axis=-1, keepdims=True)   # single 128->1 XLU reduce
        if area:
            out_ref[...] = acc                                 # weight NOT applied (matches torch)
        elif norm == 'l1':
            out_ref[...] = weight * jnp.abs(acc)
        else:                                                  # 'l2'
            out_ref[...] = weight * (acc * acc)


def self_intersection_energy_pallas(planes, tile_n, tile_t, weight, norm='l1', area=False):
    """planes: (9, Np, Tp) float32 with Np % tile_n == 0 and Tp % tile_t == 0.

    Returns the summed energy over all (padded) regions in `planes`.
    """
    if norm not in ('l1', 'l2'):
        raise ValueError(f'Unknown norm {norm}')
    _, Np, Tp = planes.shape
    assert Np % tile_n == 0 and Tp % tile_t == 0

    kernel = functools.partial(
        _energy_kernel, weight=float(weight), norm=norm, area=area)

    vmem_cap = _vmem_capacity_bytes()
    # double-buffered f32 input blocks + small output/scratch + headroom,
    # clamped well below the physical per-core capacity (v7x: 64 MiB).
    needed = 2 * 9 * tile_n * tile_t * 4 + 3 * tile_n * 128 * 4
    vmem_limit = int(max(min(needed + (8 << 20), vmem_cap - (8 << 20)), 16 << 20))

    per_region = pl.pallas_call(
        kernel,
        out_shape=jax.ShapeDtypeStruct((Np, 1), jnp.float32),
        grid=(Np // tile_n, Tp // tile_t),
        in_specs=[pl.BlockSpec((9, tile_n, tile_t), lambda n, t: (0, n, t))],
        out_specs=pl.BlockSpec((tile_n, 1), lambda n, t: (n, 0)),
        scratch_shapes=[pltpu.VMEM((tile_n, 128), jnp.float32)],
        compiler_params=pltpu.CompilerParams(
            dimension_semantics=("parallel", "arbitrary"),
            vmem_limit_bytes=vmem_limit),
    )(planes)

    # Zero-padded regions contribute exactly 0 in every variant.
    return jnp.sum(per_region)


# ----------------------------------------------------------------------------- tiling

def _choose_tiles(n_total, t_max):
    """Pick (Np, Tp, tile_n, tile_t) for one bucket given the VMEM budget."""
    vmem_cap = _vmem_capacity_bytes()
    budget = int(0.6 * vmem_cap)           # double-buffered input-block budget

    t_pad = _round_up(max(int(t_max), 1), 128)
    n_pad = _round_up(max(int(n_total), 1), 8)

    # aim for >= N_TILE_TARGET tiles on the parallel N axis when regions allow
    tile_n = min(TILE_N_DEFAULT, n_pad,
                 max(8, _round_up(-(-n_pad // N_TILE_TARGET), 8)))

    def blk_bytes(tn, tt):
        return 2 * 9 * tn * tt * 4

    if t_pad <= TILE_T_CAP and blk_bytes(tile_n, t_pad) <= budget:
        tile_t = t_pad                      # single T tile: no reduction loop at all
    else:
        tile_t = min(TILE_T_CAP,
                     max(128, (budget // blk_bytes(tile_n, 128)) * 128))
        while blk_bytes(tile_n, tile_t) > budget and tile_n > 8:
            tile_n = max(8, _round_up(tile_n // 2, 8))

    Np = _round_up(n_total, tile_n)
    Tp = _round_up(t_pad, tile_t)
    return Np, Tp, tile_n, tile_t


def batch_planes(planes_list):
    """Pad each example's T to the bucket Tp, concat along N, pad N to Np."""
    n_total = sum(int(p.shape[1]) for p in planes_list)
    t_max = max(int(p.shape[2]) for p in planes_list)
    Np, Tp, tile_n, tile_t = _choose_tiles(n_total, t_max)

    padded = [jnp.pad(p, ((0, 0), (0, 0), (0, Tp - p.shape[2]))) for p in planes_list]
    P = jnp.concatenate(padded, axis=1)
    P = jnp.pad(P, ((0, 0), (0, Np - n_total), (0, 0)))
    return P, tile_n, tile_t


# ----------------------------------------------------------------------------- JAX glue
# Reproduces the (torch) gather / barycentric glue of Criterion.calc_single and
# produces the component-planar (9, N, T) layout the kernel consumes directly.

def example_planes(ex):
    v = ex['v']
    for bp in ex['boundary_paths']:
        centre = jnp.mean(v[bp], axis=0, keepdims=True)
        v = jnp.vstack([v, centre])

    ff = jnp.vstack([ex['ff'], jnp.zeros((1, 3), ex['ff'].dtype)])
    unassembled = v[ex['new_v_indices']]                               # [M, 3, 3]
    new_v = jnp.sum(unassembled * ex['new_v_bary'][:, :, None], axis=1)
    final_v = jnp.vstack([v, new_v]).astype(jnp.float32)

    lists = ex['inner_f_one_batch']
    T = max(len(l) for l in lists)
    padded = np.full((len(lists), T), ff.shape[0] - 1, dtype=np.int32)  # pad -> zero face
    for i, l in enumerate(lists):
        padded[i, :len(l)] = l
    inner_vert_ids = ff[jnp.asarray(padded)]                            # [N, T, 3]

    # component-planar gathers: (9, N, T) with index = point*3 + component
    planes = jnp.stack(
        [final_v[inner_vert_ids[:, :, j], c] for j in range(3) for c in range(3)],
        axis=0)
    return planes


def ref_energy_planar(planes, weight, norm, area):
    p0 = jnp.moveaxis(planes[0:3], 0, -1)   # (N, T, 3)
    p1 = jnp.moveaxis(planes[3:6], 0, -1)
    p2 = jnp.moveaxis(planes[6:9], 0, -1)
    if not area:
        c = jnp.cross(p1, p2, axis=-1)
        d = jnp.sum(p0 * c, axis=(-1, -2))
        if norm == 'l1':
            return weight * jnp.sum(jnp.abs(d))
        return weight * jnp.sum(d * d)
    v01, v12 = p1 - p0, p2 - p1
    return jnp.sum(jnp.linalg.norm(jnp.cross(v01, v12, axis=-1), axis=-1))


def make_example(key, V=64, F=10, M=6, region_lens=(4, 2, 5), n_boundaries=2):
    k1, k2, k3, k4, k5 = jax.random.split(key, 5)
    v = jax.random.normal(k1, (V, 3), jnp.float32)
    boundary_paths = [jnp.arange(0, 8), jnp.arange(8, 20)]
    total_v = V + n_boundaries + M
    ff = jax.random.randint(k2, (F, 3), 0, total_v, dtype=jnp.int32)
    new_v_indices = jax.random.randint(k3, (M, 3), 0, V + n_boundaries, dtype=jnp.int32)
    bary = jax.random.uniform(k4, (M, 3), jnp.float32) + 0.1
    new_v_bary = bary / jnp.sum(bary, axis=1, keepdims=True)
    face_ids = np.asarray(jax.random.randint(k5, (sum(region_lens),), 0, F, dtype=jnp.int32))
    inner_f, off = [], 0
    for L in region_lens:
        inner_f.append([int(x) for x in face_ids[off:off + L]])
        off += L
    return dict(v=v, boundary_paths=boundary_paths, ff=ff,
                new_v_indices=new_v_indices, new_v_bary=new_v_bary,
                inner_f_one_batch=inner_f, garment_name='shirt')


def criterion_forward(examples, weight=1.5, norm='l1', area=False):
    """Mirrors Criterion.forward: average per-example energy over the batch.
    Examples are bucketed by padded triangle count so no example is padded to
    the global batch max; each bucket is one pallas_call."""
    B = len(examples)
    active = [ex for ex in examples
              if ex.get('garment_name') != 'tshirt_unzipped' and ex['inner_f_one_batch']]
    if not active:
        zero = jnp.float32(0.0)
        return dict(loss=zero), zero

    planes_list = [example_planes(ex) for ex in active]

    buckets = {}
    for p in planes_list:
        buckets.setdefault(_round_up(int(p.shape[2]), 128), []).append(p)

    total = jnp.float32(0.0)
    for _, plist in sorted(buckets.items()):
        P, tile_n, tile_t = batch_planes(plist)
        total = total + self_intersection_energy_pallas(P, tile_n, tile_t, weight, norm, area)
    loss = total / B

    loss_ref = sum(ref_energy_planar(p, weight, norm, area) for p in planes_list) / B
    return dict(loss=loss), loss_ref


if __name__ == "__main__":
    key = jax.random.PRNGKey(0)
    B = 2
    examples = [make_example(k) for k in jax.random.split(key, B)]

    out, loss_ref = criterion_forward(examples, weight=1.5, norm='l1', area=False)
    loss = jax.block_until_ready(out['loss'])
    assert jnp.allclose(loss, loss_ref, rtol=1e-4, atol=1e-4), (loss, loss_ref)

    # also exercise the l2 and area variants of the kernel
    out_l2, ref_l2 = criterion_forward(examples, weight=2.0, norm='l2', area=False)
    out_ar, ref_ar = criterion_forward(examples, weight=1.0, norm='l1', area=True)
    jax.block_until_ready((out_l2['loss'], out_ar['loss']))
    assert jnp.allclose(out_l2['loss'], ref_l2, rtol=1e-4, atol=1e-4), (out_l2['loss'], ref_l2)
    assert jnp.allclose(out_ar['loss'], ref_ar, rtol=1e-4, atol=1e-4), (out_ar['loss'], ref_ar)

    print("KERNEL_OK")
</pallas_src>

<mosaic_0001>
module attributes {stable_mosaic.version = 11 : i64} {
  func.func @_energy_kernel(%arg0: i32, %arg1: i32, %arg2: memref<9x8x128xf32, #tpu.memory_space<vmem>>, %arg3: memref<8x1xf32, #tpu.memory_space<vmem>>, %arg4: memref<8x128xf32, #tpu.memory_space<vmem>>) attributes {dimension_semantics = [#tpu.dimension_semantics<parallel>, #tpu.dimension_semantics<arbitrary>], iteration_bounds = array<i64: 1, 1>, scalar_prefetch = 0 : i64, scratch_operands = 1 : i64, tpu.core_type = #tpu.core_type<tc>, window_params = [{transform_indices = @transform_0, window_bounds = array<i64: 9, 8, 128>}, {transform_indices = @transform_1, window_bounds = array<i64: 8, 1>}]} {
    %c0_i32 = arith.constant 0 : i32
    %0 = arith.cmpi eq, %arg1, %c0_i32 : i32
    %1 = arith.extui %0 : i1 to i32
    %c0_i32_0 = arith.constant 0 : i32
    %2 = arith.cmpi ne, %1, %c0_i32_0 : i32
    scf.if %2 {
      %cst = arith.constant 0.000000e+00 : f32
      %41 = vector.broadcast %cst : f32 to vector<8x128xf32>
      %c0_25 = arith.constant 0 : index
      %c0_26 = arith.constant 0 : index
      %42 = vector.load %arg4[%c0_25, %c0_26] : memref<8x128xf32, #tpu.memory_space<vmem>>, vector<8x128xf32>
      tpu.vector_store %arg4[%c0_25, %c0_26], %41 {strides = array<i32>} : memref<8x128xf32, #tpu.memory_space<vmem>>, vector<8x128xf32>,
    } else {
    }
    %c0 = arith.constant 0 : index
    %c0_1 = arith.constant 0 : index
    %c0_2 = arith.constant 0 : index
    %3 = vector.load %arg2[%c0, %c0_1, %c0_2] : memref<9x8x128xf32, #tpu.memory_space<vmem>>, vector<1x8x128xf32>
    %4 = vector.shape_cast %3 : vector<1x8x128xf32> to vector<8x128xf32>
    %c1 = arith.constant 1 : index
    %c0_3 = arith.constant 0 : index
    %c0_4 = arith.constant 0 : index
    %5 = vector.load %arg2[%c1, %c0_3, %c0_4] : memref<9x8x128xf32, #tpu.memory_space<vmem>>, vector<1x8x128xf32>
    %6 = vector.shape_cast %5 : vector<1x8x128xf32> to vector<8x128xf32>
    %c2 = arith.constant 2 : index
    %c0_5 = arith.constant 0 : index
    %c0_6 = arith.constant 0 : index
    %7 = vector.load %arg2[%c2, %c0_5, %c0_6] : memref<9x8x128xf32, #tpu.memory_space<vmem>>, vector<1x8x128xf32>
    %8 = vector.shape_cast %7 : vector<1x8x128xf32> to vector<8x128xf32>
    %c3 = arith.constant 3 : index
    %c0_7 = arith.constant 0 : index
    %c0_8 = arith.constant 0 : index
    %9 = vector.load %arg2[%c3, %c0_7, %c0_8] : memref<9x8x128xf32, #tpu.memory_space<vmem>>, vector<1x8x128xf32>
    %10 = vector.shape_cast %9 : vector<1x8x128xf32> to vector<8x128xf32>
    %c4 = arith.constant 4 : index
    %c0_9 = arith.constant 0 : index
    %c0_10 = arith.constant 0 : index
    %11 = vector.load %arg2[%c4, %c0_9, %c0_10] : memref<9x8x128xf32, #tpu.memory_space<vmem>>, vector<1x8x128xf32>
    %12 = vector.shape_cast %11 : vector<1x8x128xf32> to vector<8x128xf32>
    %c5 = arith.constant 5 : index
    %c0_11 = arith.constant 0 : index
    %c0_12 = arith.constant 0 : index
    %13 = vector.load %arg2[%c5, %c0_11, %c0_12] : memref<9x8x128xf32, #tpu.memory_space<vmem>>, vector<1x8x128xf32>
    %14 = vector.shape_cast %13 : vector<1x8x128xf32> to vector<8x128xf32>
    %c6 = arith.constant 6 : index
    %c0_13 = arith.constant 0 : index
    %c0_14 = arith.constant 0 : index
    %15 = vector.load %arg2[%c6, %c0_13, %c0_14] : memref<9x8x128xf32, #tpu.memory_space<vmem>>, vector<1x8x128xf32>
    %16 = vector.shape_cast %15 : vector<1x8x128xf32> to vector<8x128xf32>
    %c7 = arith.constant 7 : index
    %c0_15 = arith.constant 0 : index
    %c0_16 = arith.constant 0 : index
    %17 = vector.load %arg2[%c7, %c0_15, %c0_16] : memref<9x8x128xf32, #tpu.memory_space<vmem>>, vector<1x8x128xf32>
    %18 = vector.shape_cast %17 : vector<1x8x128xf32> to vector<8x128xf32>
    %c8 = arith.constant 8 : index
    %c0_17 = arith.constant 0 : index
    %c0_18 = arith.constant 0 : index
    %19 = vector.load %arg2[%c8, %c0_17, %c0_18] : memref<9x8x128xf32, #tpu.memory_space<vmem>>, vector<1x8x128xf32>
    %20 = vector.shape_cast %19 : vector<1x8x128xf32> to vector<8x128xf32>
    %21 = arith.mulf %12, %20 : vector<8x128xf32>
    %22 = arith.mulf %14, %18 : vector<8x128xf32>
    %23 = arith.subf %21, %22 : vector<8x128xf32>
    %24 = arith.mulf %14, %16 : vector<8x128xf32>
    %25 = arith.mulf %10, %20 : vector<8x128xf32>
    %26 = arith.subf %24, %25 : vector<8x128xf32>
    %27 = arith.mulf %10, %18 : vector<8x128xf32>
    %28 = arith.mulf %12, %16 : vector<8x128xf32>
    %29 = arith.subf %27, %28 : vector<8x128xf32>
    %30 = arith.mulf %4, %23 : vector<8x128xf32>
    %31 = arith.mulf %6, %26 : vector<8x128xf32>
    %32 = arith.addf %30, %31 : vector<8x128xf32>
    %33 = arith.mulf %8, %29 : vector<8x128xf32>
    %34 = arith.addf %32, %33 : vector<8x128xf32>
    %c0_19 = arith.constant 0 : index
    %c0_20 = arith.constant 0 : index
    %35 = vector.load %arg4[%c0_19, %c0_20] : memref<8x128xf32, #tpu.memory_space<vmem>>, vector<8x128xf32>
    %36 = arith.addf %35, %34 : vector<8x128xf32>
    %c0_21 = arith.constant 0 : index
    %c0_22 = arith.constant 0 : index
    %37 = vector.load %arg4[%c0_21, %c0_22] : memref<8x128xf32, #tpu.memory_space<vmem>>, vector<8x128xf32>
    tpu.vector_store %arg4[%c0_21, %c0_22], %36 {strides = array<i32>} : memref<8x128xf32, #tpu.memory_space<vmem>>, vector<8x128xf32>,
    %c0_i32_23 = arith.constant 0 : i32
    %38 = arith.cmpi eq, %arg1, %c0_i32_23 : i32
    %39 = arith.extui %38 : i1 to i32
    %c0_i32_24 = arith.constant 0 : i32
    %40 = arith.cmpi ne, %39, %c0_i32_24 : i32
    scf.if %40 {
      %c0_25 = arith.constant 0 : index
      %c0_26 = arith.constant 0 : index
      %41 = vector.load %arg4[%c0_25, %c0_26] : memref<8x128xf32, #tpu.memory_space<vmem>>, vector<8x128xf32>
      %cst = arith.constant dense<0.000000e+00> : vector<8xf32>
      %42 = vector.multi_reduction <add>, %41, %cst [1] : vector<8x128xf32> to vector<8xf32>
      %43 = vector.shape_cast %42 : vector<8xf32> to vector<8x1xf32>
      %44 = math.absf %43 : vector<8x1xf32>
      %cst_27 = arith.constant 1.500000e+00 : f32
      %45 = vector.broadcast %cst_27 : f32 to vector<8x1xf32>
      %46 = arith.mulf %45, %44 : vector<8x1xf32>
      %c0_28 = arith.constant 0 : index
      %c0_29 = arith.constant 0 : index
      %47 = vector.load %arg3[%c0_28, %c0_29] : memref<8x1xf32, #tpu.memory_space<vmem>>, vector<8x1xf32>
      tpu.vector_store %arg3[%c0_28, %c0_29], %46 {strides = array<i32>} : memref<8x1xf32, #tpu.memory_space<vmem>>, vector<8x1xf32>,
    } else {
    }
    return
  }
  func.func @transform_0(%arg0: i32, %arg1: i32) -> (i32, i32, i32) {
    %c0_i32 = arith.constant 0 : i32
    %c0_i32_0 = arith.constant 0 : i32
    return %c0_i32, %arg0, %arg1 : i32, i32, i32
  }
  func.func @transform_1(%arg0: i32, %arg1: i32) -> (i32, i32) {
    %c0_i32 = arith.constant 0 : i32
    %c0_i32_0 = arith.constant 0 : i32
    return %arg0, %c0_i32 : i32, i32
  }
}

</mosaic_0001>

<llo_original>
// kernel: tpu_custom_call.1
$region0: #{tpu_custom_call.1}
  #allocation0 [shape = 'u32[]', space=smem, size = 0x4, offset = 0x4, fixed_abs, tag = 'smem constant byte address 0x4 - core index']
  #allocation1 [shape = 'u32[144,128]{1,0:T(1,128)}', space=vmem, size = 0x12000, scoped, tag = 'internal scratch']
  #allocation2 [shape = 'f32[8,128]{1,0:T(8,128)}', space=vmem, size = 0x1000, scoped, tag = 'scratch operand']
  %s0 = inlined_call_operand.hbm [shape: f32[9,8,128], index: 0, kind: input, shape index: {}]
  %s1 = inlined_call_operand.vmem [shape: f32[8,1], index: 1, kind: output, shape index: {}]
  %s2 = sld [smem:[#allocation0]]
  $region26: #{tpu_custom_call.1} parent=0
    _
  %s4 = ssub.s32 1, %s2
  %s5 = scalar_select 0, %s4, %s2
  $region1: #{tpu_custom_call.1} parent=0
    #allocation3 [shape = 'u8[36864]{0}', space=vmem, size = 0x9000, scoped, tag = 'input window, operand 0, single buffered']
    #allocation4 [shape = 's32[1]{0}', space=sflag, size = 0x4, scoped, tag = 'scoped memory for tpu_custom_call.1']
    %6 = vsyncpa [#allocation4], 0
    // Predicated region
    $region2: #{tpu_custom_call.1} parent=1 // pred_check
      _
    $region3: #{tpu_custom_call.1} parent=1 // pred_check_branch
      %8 = sbr.rel (0) target = $region5
    $region4: #{tpu_custom_call.1} parent=1 // pred_region
      %s10 = ssub.s32 1152, 1152
      %11 = vsyncadd [#allocation4], %s10
      %s12 = sshll.u32 [#allocation3], 4
      %s13 = int_to_ptr.vmem [resolvable:$true] %s12
      %18 = dma.hbm_to_vmem [thread:$0]  %s0, 1152, %s13, [#allocation4], 128, 128, 8
    $region5: #{tpu_custom_call.1} parent=1 // pred_fallthru
      _
    // Predicated region
    $region6: #{tpu_custom_call.1} parent=1 // pred_check
      _
    $region7: #{tpu_custom_call.1} parent=1 // pred_check_branch
      %20 = sbr.rel (0) target = $region9
    $region8: #{tpu_custom_call.1} parent=1 // pred_region
      %21 = dma.done [#allocation4], 1152
    $region9: #{tpu_custom_call.1} parent=1 // pred_fallthru
      _
    %p22 = scmp.eq.s32.totalorder 0, 0
    // Predicated region
    $region10: #{tpu_custom_call.1} parent=1 // pred_check
      %p23 = pneg %p22
    $region11: #{tpu_custom_call.1} parent=1 // pred_check_branch
      %25 = sbr.rel (%p23) target = $region13
    $region12: #{tpu_custom_call.1} parent=1 // pred_region
      %26 = vst [vmem:[#allocation2] sm:$0xff] 0.0
    $region13: #{tpu_custom_call.1} parent=1 // pred_fallthru
      _
    %v27 = vld [vmem:[#allocation3] sm:$0xff]
    %s28 = scalar_lea.vmem [#allocation3], 8
    %v29 = vld [vmem:[%s28] sm:$0xff]
    %s30 = scalar_lea.vmem [#allocation3], 16
    %v31 = vld [vmem:[%s30] sm:$0xff]
    %s32 = scalar_lea.vmem [#allocation3], 24
    %v33 = vld [vmem:[%s32] sm:$0xff]
    %s34 = scalar_lea.vmem [#allocation3], 32
    %v35 = vld [vmem:[%s34] sm:$0xff]
    %s36 = scalar_lea.vmem [#allocation3], 40
    %v37 = vld [vmem:[%s36] sm:$0xff]
    %s38 = scalar_lea.vmem [#allocation3], 48
    %v39 = vld [vmem:[%s38] sm:$0xff]
    %s40 = scalar_lea.vmem [#allocation3], 56
    %v41 = vld [vmem:[%s40] sm:$0xff]
    %s42 = scalar_lea.vmem [#allocation3], 64
    %v43 = vld [vmem:[%s42] sm:$0xff]
    %v44 = vmul.f32 %v35, %v43
    %v45 = vmul.f32 %v37, %v41
    %v46 = vsub.f32 %v44, %v45
    %v47 = vmul.f32 %v37, %v39
    %v48 = vmul.f32 %v33, %v43
    %v49 = vsub.f32 %v47, %v48
    %v50 = vmul.f32 %v33, %v41
    %v51 = vmul.f32 %v35, %v39
    %v52 = vsub.f32 %v50, %v51
    %v53 = vmul.f32 %v27, %v46
    %v54 = vmul.f32 %v29, %v49
    %v55 = vadd.f32 %v53, %v54
    %v56 = vmul.f32 %v31, %v52
    %v57 = vadd.f32 %v55, %v56
    %v58 = vld [vmem:[#allocation2] sm:$0xff]
    %v59 = vadd.f32 %v58, %v57
    %60 = vst [vmem:[#allocation2] sm:$0xff] %v59
    // Predicated region
    $region14: #{tpu_custom_call.1} parent=1 // pred_check
      %p61 = pneg %p22
    $region15: #{tpu_custom_call.1} parent=1 // pred_check_branch
      %63 = sbr.rel (%p61) target = $region17
    $region16: #{tpu_custom_call.1} parent=1 // pred_region
      %v64 = vld [vmem:[#allocation2] sm:$0xff]
      %65 = vadd.xlane.f32.xlu0 %v64
      %v66 = vpop.xlane.xlu0 %65
      %v67 = vand.u32 2147483647, %v66
      %v68 = vmul.f32 %v67, 1.5
      %vm69 = vcmask 7168
      %70 = vst.msk [vmem:[%s1] sm:$0xff] %vm69, %v68
    $region17: #{tpu_custom_call.1} parent=1 // pred_fallthru
      _
    // Predicated region
    $region18: #{tpu_custom_call.1} parent=1 // pred_check
      _
    $region19: #{tpu_custom_call.1} parent=1 // pred_check_branch
      %72 = sbr.rel (0) target = $region21
    $region20: #{tpu_custom_call.1} parent=1 // pred_region
      _
    $region21: #{tpu_custom_call.1} parent=1 // pred_fallthru
      _
    // Predicated region
    $region22: #{tpu_custom_call.1} parent=1 // pred_check
      _
    $region23: #{tpu_custom_call.1} parent=1 // pred_check_branch
      %74 = sbr.rel (0) target = $region25
    $region24: #{tpu_custom_call.1} parent=1 // pred_region
      _
    $region25: #{tpu_custom_call.1} parent=1 // pred_fallthru
      _
    %75 = vsyncpa [#allocation4], 1

</llo_original>
